<compile_context>
chip_gen: v6e
topology: v6e:2x2x1
jax: 0.10.0
libtpu: 0.0.40
codegen_flags: <defaults>
</compile_context>

<pallas_src>
import functools

import jax
import jax.numpy as jnp
from jax.experimental import pallas as pl
from jax.experimental.pallas import tpu as pltpu


# --------------------------------------------------------------------------
# Pass 1: global average pool + squeeze/excite FCs  ->  y of shape (N, C, 1)
# --------------------------------------------------------------------------
def _pool_fc_kernel(x_ref, w1_ref, b1_ref, w2_ref, b2_ref, y_ref, acc_ref, *,
                    hw_total):
    hw_i = pl.program_id(1)

    @pl.when(hw_i == 0)
    def _():
        acc_ref[...] = jnp.zeros_like(acc_ref)

    x = x_ref[...].astype(jnp.float32)                      # (Bn, C, THW)
    thw = x.shape[-1]
    if hw_total % thw != 0:
        # Partial last HW tile: mask out padded lanes so the mean is exact.
        pos = hw_i * thw + jax.lax.broadcasted_iota(jnp.int32, x.shape, 2)
        x = jnp.where(pos < hw_total, x, 0.0)
    acc_ref[...] += jnp.sum(x, axis=-1)                     # (Bn, C)

    @pl.when(hw_i == pl.num_programs(1) - 1)
    def _():
        pooled = acc_ref[...] * (1.0 / hw_total)            # (Bn, C)
        w1 = w1_ref[...]                                    # (Cr, C)
        b1 = b1_ref[...]                                    # (Cr, 1)
        w2 = w2_ref[...]                                    # (C, Cr)
        b2 = b2_ref[...]                                    # (C, 1)
        # Tiny FCs on the VPU; a 1-lane-wide MXU pass would waste the
        # systolic array and add fill/drain latency per grid step.
        hid = jnp.sum(pooled[:, None, :] * w1[None, :, :], axis=-1) \
            + b1[None, :, 0]                                # (Bn, Cr)
        hid = jnp.maximum(hid, 0.0)                         # ReLU
        y = jnp.sum(hid[:, None, :] * w2[None, :, :], axis=-1) \
            + b2[None, :, 0]                                # (Bn, C)
        y_ref[...] = jax.nn.sigmoid(y)[:, :, None].astype(y_ref.dtype)


# --------------------------------------------------------------------------
# Pass 2: lane-dense elementwise scale  out[n, c, hw] = x[n, c, hw] * y[n, c]
# --------------------------------------------------------------------------
def _scale_kernel(x_ref, y_ref, o_ref):
    x = x_ref[...].astype(jnp.float32)                      # (Bn, C, THW)
    y = y_ref[...].astype(jnp.float32)                      # (Bn, C, 1)
    o_ref[...] = (x * y).astype(o_ref.dtype)


# --------------------------------------------------------------------------
# Tiling: aim for ~target_bytes per input block (big, lane-dense blocks).
# --------------------------------------------------------------------------
def _choose_tiles(N, C, HW, itemsize, target_bytes):
    bytes_per_sample = C * HW * itemsize
    if bytes_per_sample <= target_bytes:
        # Whole-sample blocks; batch samples to fatten the block.
        bn = max(1, min(N, target_bytes // bytes_per_sample))
        return int(bn), int(HW)
    # One sample per block; tile HW on the lane axis in multiples of 128.
    lanes = max(128, (target_bytes // (C * itemsize)) // 128 * 128)
    return 1, int(min(lanes, HW))


def ca_layer(x_nchw, w1, b1, w2, b2, *, target_block_bytes=2 << 20):
    """x_nchw: (N, C, H, W).  w1: (C//r, C), b1: (C//r, 1), w2: (C, C//r), b2: (C, 1)."""
    N, C, H, W = x_nchw.shape
    HW = H * W
    Cr = w1.shape[0]
    x_flat = x_nchw.reshape(N, C, HW)
    itemsize = jnp.dtype(x_flat.dtype).itemsize

    bn, thw = _choose_tiles(N, C, HW, itemsize, target_block_bytes)
    grid = (pl.cdiv(N, bn), pl.cdiv(HW, thw))

    # Blocks are <= ~2 MiB, so double-buffered in+out stays well under the
    # 32 MiB scoped limit (safe on v7x's 64 MiB physical VMEM too).
    vmem_limit = 32 * 1024 * 1024

    # ---- pass 1: pooled channel gates y (N, C, 1) -------------------------
    y = pl.pallas_call(
        functools.partial(_pool_fc_kernel, hw_total=HW),
        out_shape=jax.ShapeDtypeStruct((N, C, 1), jnp.float32),
        grid=grid,
        in_specs=[
            pl.BlockSpec((bn, C, thw), lambda n, h: (n, 0, h)),   # x
            pl.BlockSpec((Cr, C), lambda n, h: (0, 0)),           # W1 (resident)
            pl.BlockSpec((Cr, 1), lambda n, h: (0, 0)),           # b1
            pl.BlockSpec((C, Cr), lambda n, h: (0, 0)),           # W2
            pl.BlockSpec((C, 1), lambda n, h: (0, 0)),            # b2
        ],
        out_specs=pl.BlockSpec((bn, C, 1), lambda n, h: (n, 0, 0)),
        scratch_shapes=[pltpu.VMEM((bn, C), jnp.float32)],        # pooled-sum acc
        compiler_params=pltpu.CompilerParams(
            dimension_semantics=("parallel", "arbitrary"),
            vmem_limit_bytes=vmem_limit,
        ),
    )(x_flat, w1, b1, w2, b2)

    # ---- pass 2: out = x * y  (fully parallel, lane-dense) ----------------
    out_flat = pl.pallas_call(
        _scale_kernel,
        out_shape=jax.ShapeDtypeStruct((N, C, HW), x_flat.dtype),
        grid=grid,
        in_specs=[
            pl.BlockSpec((bn, C, thw), lambda n, h: (n, 0, h)),   # x
            pl.BlockSpec((bn, C, 1), lambda n, h: (n, 0, 0)),     # y
        ],
        out_specs=pl.BlockSpec((bn, C, thw), lambda n, h: (n, 0, h)),
        compiler_params=pltpu.CompilerParams(
            dimension_semantics=("parallel", "parallel"),
            vmem_limit_bytes=vmem_limit,
        ),
    )(x_flat, y)

    return out_flat.reshape(N, C, H, W)


def reference_ca_layer(x, w1, b1, w2, b2):
    pooled = jnp.mean(x, axis=(2, 3))                      # (N, C)
    hid = jnp.maximum(pooled @ w1.T + b1[:, 0], 0.0)       # (N, Cr)
    y = jax.nn.sigmoid(hid @ w2.T + b2[:, 0])              # (N, C)
    return x * y[:, :, None, None]


if __name__ == "__main__":
    # Shapes consistent with CALayer(channel=32, reduction=16)
    N, C, H, W = 2, 32, 16, 16
    reduction = 16
    Cr = C // reduction  # 2

    key = jax.random.PRNGKey(0)
    kx, k1, k2, k3, k4 = jax.random.split(key, 5)

    x = jax.random.normal(kx, (N, C, H, W), dtype=jnp.float32)

    # 1x1 conv weights squeezed to 2-D matrices.
    w1 = jax.random.normal(k1, (Cr, C), dtype=jnp.float32) * 0.1   # conv1 weight (Cr, C, 1, 1)
    b1 = jax.random.normal(k2, (Cr, 1), dtype=jnp.float32) * 0.1   # conv1 bias
    w2 = jax.random.normal(k3, (C, Cr), dtype=jnp.float32) * 0.1   # conv2 weight (C, Cr, 1, 1)
    b2 = jax.random.normal(k4, (C, 1), dtype=jnp.float32) * 0.1    # conv2 bias

    out = ca_layer(x, w1, b1, w2, b2)
    out = jax.block_until_ready(out)

    ref = reference_ca_layer(x, w1, b1, w2, b2)
    assert out.shape == (N, C, H, W)
    assert jnp.allclose(out, ref, atol=1e-5, rtol=1e-5), "mismatch vs reference"

    print("KERNEL_OK")
</pallas_src>

<mosaic_0001>
module attributes {stable_mosaic.version = 11 : i64} {
  func.func @_pool_fc_kernel(%arg0: i32, %arg1: i32, %arg2: memref<2x32x256xf32, #tpu.memory_space<vmem>>, %arg3: memref<2x32xf32, #tpu.memory_space<vmem>>, %arg4: memref<2x1xf32, #tpu.memory_space<vmem>>, %arg5: memref<32x2xf32, #tpu.memory_space<vmem>>, %arg6: memref<32x1xf32, #tpu.memory_space<vmem>>, %arg7: memref<2x32x1xf32, #tpu.memory_space<vmem>>, %arg8: memref<2x32xf32, #tpu.memory_space<vmem>>) attributes {dimension_semantics = [#tpu.dimension_semantics<parallel>, #tpu.dimension_semantics<arbitrary>], iteration_bounds = array<i64: 1, 1>, scalar_prefetch = 0 : i64, scratch_operands = 1 : i64, tpu.core_type = #tpu.core_type<tc>, window_params = [{transform_indices = @transform_0, window_bounds = array<i64: 2, 32, 256>}, {pipeline_mode = #tpu.pipeline_mode<synchronous>, transform_indices = @transform_1, window_bounds = array<i64: 2, 32>}, {pipeline_mode = #tpu.pipeline_mode<synchronous>, transform_indices = @transform_2, window_bounds = array<i64: 2, 1>}, {pipeline_mode = #tpu.pipeline_mode<synchronous>, transform_indices = @transform_3, window_bounds = array<i64: 32, 2>}, {pipeline_mode = #tpu.pipeline_mode<synchronous>, transform_indices = @transform_4, window_bounds = array<i64: 32, 1>}, {transform_indices = @transform_5, window_bounds = array<i64: 2, 32, 1>}]} {
    %c0_i32 = arith.constant 0 : i32
    %0 = arith.cmpi eq, %arg1, %c0_i32 : i32
    %1 = arith.extui %0 : i1 to i32
    %c0_i32_0 = arith.constant 0 : i32
    %2 = arith.cmpi ne, %1, %c0_i32_0 : i32
    scf.if %2 {
      %cst_9 = arith.constant 0.000000e+00 : f32
      %11 = vector.broadcast %cst_9 : f32 to vector<2x32xf32>
      %c0_10 = arith.constant 0 : index
      %c0_11 = arith.constant 0 : index
      %12 = vector.load %arg8[%c0_10, %c0_11] : memref<2x32xf32, #tpu.memory_space<vmem>>, vector<2x32xf32>
      tpu.vector_store %arg8[%c0_10, %c0_11], %11 {strides = array<i32>} : memref<2x32xf32, #tpu.memory_space<vmem>>, vector<2x32xf32>,
    } else {
    }
    %c0 = arith.constant 0 : index
    %c0_1 = arith.constant 0 : index
    %c0_2 = arith.constant 0 : index
    %3 = vector.load %arg2[%c0, %c0_1, %c0_2] : memref<2x32x256xf32, #tpu.memory_space<vmem>>, vector<2x32x256xf32>
    %c0_3 = arith.constant 0 : index
    %c0_4 = arith.constant 0 : index
    %4 = vector.load %arg8[%c0_3, %c0_4] : memref<2x32xf32, #tpu.memory_space<vmem>>, vector<2x32xf32>
    %cst = arith.constant dense<0.000000e+00> : vector<2x32xf32>
    %5 = vector.multi_reduction <add>, %3, %cst [2] : vector<2x32x256xf32> to vector<2x32xf32>
    %6 = arith.addf %4, %5 : vector<2x32xf32>
    %c0_5 = arith.constant 0 : index
    %c0_6 = arith.constant 0 : index
    %7 = vector.load %arg8[%c0_5, %c0_6] : memref<2x32xf32, #tpu.memory_space<vmem>>, vector<2x32xf32>
    tpu.vector_store %arg8[%c0_5, %c0_6], %6 {strides = array<i32>} : memref<2x32xf32, #tpu.memory_space<vmem>>, vector<2x32xf32>,
    %c0_i32_7 = arith.constant 0 : i32
    %8 = arith.cmpi eq, %arg1, %c0_i32_7 : i32
    %9 = arith.extui %8 : i1 to i32
    %c0_i32_8 = arith.constant 0 : i32
    %10 = arith.cmpi ne, %9, %c0_i32_8 : i32
    scf.if %10 {
      %c0_9 = arith.constant 0 : index
      %c0_10 = arith.constant 0 : index
      %11 = vector.load %arg8[%c0_9, %c0_10] : memref<2x32xf32, #tpu.memory_space<vmem>>, vector<2x32xf32>
      %cst_11 = arith.constant 3.906250e-03 : f32
      %12 = vector.broadcast %cst_11 : f32 to vector<2x32xf32>
      %13 = arith.mulf %11, %12 : vector<2x32xf32>
      %c0_12 = arith.constant 0 : index
      %c0_13 = arith.constant 0 : index
      %14 = vector.load %arg3[%c0_12, %c0_13] : memref<2x32xf32, #tpu.memory_space<vmem>>, vector<2x32xf32>
      %c0_14 = arith.constant 0 : index
      %c0_15 = arith.constant 0 : index
      %15 = vector.load %arg4[%c0_14, %c0_15] : memref<2x1xf32, #tpu.memory_space<vmem>>, vector<2x1xf32>
      %c0_16 = arith.constant 0 : index
      %c0_17 = arith.constant 0 : index
      %16 = vector.load %arg5[%c0_16, %c0_17] : memref<32x2xf32, #tpu.memory_space<vmem>>, vector<32x2xf32>
      %c0_18 = arith.constant 0 : index
      %c0_19 = arith.constant 0 : index
      %17 = vector.load %arg6[%c0_18, %c0_19] : memref<32x1xf32, #tpu.memory_space<vmem>>, vector<32x1xf32>
      %18 = vector.shape_cast %13 : vector<2x32xf32> to vector<2x1x32xf32>
      %19 = vector.shape_cast %14 : vector<2x32xf32> to vector<1x2x32xf32>
      %20 = vector.broadcast %18 : vector<2x1x32xf32> to vector<2x2x32xf32>
      %21 = vector.broadcast %19 : vector<1x2x32xf32> to vector<2x2x32xf32>
      %22 = arith.mulf %20, %21 : vector<2x2x32xf32>
      %cst_20 = arith.constant dense<0.000000e+00> : vector<2x2xf32>
      %23 = vector.multi_reduction <add>, %22, %cst_20 [2] : vector<2x2x32xf32> to vector<2x2xf32>
      %24 = vector.shape_cast %15 : vector<2x1xf32> to vector<2xf32>
      %25 = vector.shape_cast %24 : vector<2xf32> to vector<1x2xf32>
      %26 = vector.broadcast %25 : vector<1x2xf32> to vector<2x2xf32>
      %27 = arith.addf %23, %26 : vector<2x2xf32>
      %cst_21 = arith.constant 0.000000e+00 : f32
      %28 = vector.broadcast %cst_21 : f32 to vector<2x2xf32>
      %29 = arith.maximumf %27, %28 : vector<2x2xf32>
      %30 = vector.shape_cast %29 : vector<2x2xf32> to vector<2x1x2xf32>
      %31 = vector.shape_cast %16 : vector<32x2xf32> to vector<1x32x2xf32>
      %32 = vector.broadcast %30 : vector<2x1x2xf32> to vector<2x32x2xf32>
      %33 = vector.broadcast %31 : vector<1x32x2xf32> to vector<2x32x2xf32>
      %34 = arith.mulf %32, %33 : vector<2x32x2xf32>
      %cst_22 = arith.constant dense<0.000000e+00> : vector<2x32xf32>
      %35 = vector.multi_reduction <add>, %34, %cst_22 [2] : vector<2x32x2xf32> to vector<2x32xf32>
      %36 = vector.shape_cast %17 : vector<32x1xf32> to vector<32xf32>
      %37 = vector.shape_cast %36 : vector<32xf32> to vector<1x32xf32>
      %38 = vector.broadcast %37 : vector<1x32xf32> to vector<2x32xf32>
      %39 = arith.addf %35, %38 : vector<2x32xf32>
      %40 = arith.negf %39 : vector<2x32xf32>
      %41 = math.exp %40 : vector<2x32xf32>
      %cst_23 = arith.constant 1.000000e+00 : f32
      %42 = vector.broadcast %cst_23 : f32 to vector<2x32xf32>
      %43 = arith.addf %42, %41 : vector<2x32xf32>
      %44 = arith.divf %42, %43 : vector<2x32xf32>
      %45 = vector.shape_cast %44 : vector<2x32xf32> to vector<2x32x1xf32>
      %c0_24 = arith.constant 0 : index
      %c0_25 = arith.constant 0 : index
      %c0_26 = arith.constant 0 : index
      %46 = vector.load %arg7[%c0_24, %c0_25, %c0_26] : memref<2x32x1xf32, #tpu.memory_space<vmem>>, vector<2x32x1xf32>
      tpu.vector_store %arg7[%c0_24, %c0_25, %c0_26], %45 {strides = array<i32>} : memref<2x32x1xf32, #tpu.memory_space<vmem>>, vector<2x32x1xf32>,
    } else {
    }
    return
  }
  func.func @transform_0(%arg0: i32, %arg1: i32) -> (i32, i32, i32) {
    %c0_i32 = arith.constant 0 : i32
    %c0_i32_0 = arith.constant 0 : i32
    return %arg0, %c0_i32, %arg1 : i32, i32, i32
  }
  func.func @transform_1(%arg0: i32, %arg1: i32) -> (i32, i32) {
    %c0_i32 = arith.constant 0 : i32
    %c0_i32_0 = arith.constant 0 : i32
    %c0_i32_1 = arith.constant 0 : i32
    return %c0_i32, %c0_i32_0 : i32, i32
  }
  func.func @transform_2(%arg0: i32, %arg1: i32) -> (i32, i32) {
    %c0_i32 = arith.constant 0 : i32
    %c0_i32_0 = arith.constant 0 : i32
    %c0_i32_1 = arith.constant 0 : i32
    return %c0_i32, %c0_i32_0 : i32, i32
  }
  func.func @transform_3(%arg0: i32, %arg1: i32) -> (i32, i32) {
    %c0_i32 = arith.constant 0 : i32
    %c0_i32_0 = arith.constant 0 : i32
    %c0_i32_1 = arith.constant 0 : i32
    return %c0_i32, %c0_i32_0 : i32, i32
  }
  func.func @transform_4(%arg0: i32, %arg1: i32) -> (i32, i32) {
    %c0_i32 = arith.constant 0 : i32
    %c0_i32_0 = arith.constant 0 : i32
    %c0_i32_1 = arith.constant 0 : i32
    return %c0_i32, %c0_i32_0 : i32, i32
  }
  func.func @transform_5(%arg0: i32, %arg1: i32) -> (i32, i32, i32) {
    %c0_i32 = arith.constant 0 : i32
    %c0_i32_0 = arith.constant 0 : i32
    %c0_i32_1 = arith.constant 0 : i32
    return %arg0, %c0_i32, %c0_i32_0 : i32, i32, i32
  }
}

</mosaic_0001>

<llo_original>
// kernel: tpu_custom_call.1
$region0: #{tpu_custom_call.1}
  #allocation0 [shape = 'u32[]', space=smem, size = 0x4, offset = 0x4, fixed_abs, tag = 'smem constant byte address 0x4 - core index']
  #allocation1 [shape = 'u32[144,128]{1,0:T(1,128)}', space=vmem, size = 0x12000, scoped, tag = 'internal scratch']
  #allocation2 [shape = 'f32[2,32]{1,0:T(2,128)}', space=vmem, size = 0x400, scoped, tag = 'scratch operand']
  %s0 = inlined_call_operand.hbm [shape: f32[2,32,256], index: 0, kind: input, shape index: {}]
  %s1 = inlined_call_operand.vmem [shape: f32[2,32], index: 1, kind: input, shape index: {}]
  %s2 = inlined_call_operand.vmem [shape: f32[2,1], index: 2, kind: input, shape index: {}]
  %s3 = inlined_call_operand.vmem [shape: f32[32,2], index: 3, kind: input, shape index: {}]
  %s4 = inlined_call_operand.vmem [shape: f32[32,1], index: 4, kind: input, shape index: {}]
  %s5 = inlined_call_operand.vmem [shape: f32[2,32,1], index: 5, kind: output, shape index: {}]
  %s6 = sld [smem:[#allocation0]]
  $region42: #{tpu_custom_call.1} parent=0
    _
  %s8 = ssub.s32 1, %s6
  %s9 = scalar_select 0, %s8, %s6
  $region1: #{tpu_custom_call.1} parent=0
    #allocation3 [shape = 'u8[65536]{0}', space=vmem, size = 0x10000, scoped, tag = 'input window, operand 0, single buffered']
    #allocation4 [shape = 's32[1]{0}', space=sflag, size = 0x4, scoped, tag = 'scoped memory for tpu_custom_call.1']
    %10 = vsyncpa [#allocation4], 0
    // Predicated region
    $region2: #{tpu_custom_call.1} parent=1 // pred_check
      _
    $region3: #{tpu_custom_call.1} parent=1 // pred_check_branch
      %12 = sbr.rel (0) target = $region5
    $region4: #{tpu_custom_call.1} parent=1 // pred_region
      %s14 = ssub.s32 2048, 2048
      %15 = vsyncadd [#allocation4], %s14
      %s16 = sshll.u32 [#allocation3], 4
      %s17 = int_to_ptr.vmem [resolvable:$true] %s16
      %22 = dma.hbm_to_vmem [thread:$0]  %s0, 2048, %s17, [#allocation4], 256, 256, 16
    $region5: #{tpu_custom_call.1} parent=1 // pred_fallthru
      _
    // Predicated region
    $region6: #{tpu_custom_call.1} parent=1 // pred_check
      _
    $region7: #{tpu_custom_call.1} parent=1 // pred_check_branch
      %24 = sbr.rel (0) target = $region9
    $region8: #{tpu_custom_call.1} parent=1 // pred_region
      _
    $region9: #{tpu_custom_call.1} parent=1 // pred_fallthru
      _
    // Predicated region
    $region10: #{tpu_custom_call.1} parent=1 // pred_check
      _
    $region11: #{tpu_custom_call.1} parent=1 // pred_check_branch
      %26 = sbr.rel (0) target = $region13
    $region12: #{tpu_custom_call.1} parent=1 // pred_region
      _
    $region13: #{tpu_custom_call.1} parent=1 // pred_fallthru
      _
    // Predicated region
    $region14: #{tpu_custom_call.1} parent=1 // pred_check
      _
    $region15: #{tpu_custom_call.1} parent=1 // pred_check_branch
      %28 = sbr.rel (0) target = $region17
    $region16: #{tpu_custom_call.1} parent=1 // pred_region
      _
    $region17: #{tpu_custom_call.1} parent=1 // pred_fallthru
      _
    // Predicated region
    $region18: #{tpu_custom_call.1} parent=1 // pred_check
      _
    $region19: #{tpu_custom_call.1} parent=1 // pred_check_branch
      %30 = sbr.rel (0) target = $region21
    $region20: #{tpu_custom_call.1} parent=1 // pred_region
      _
    $region21: #{tpu_custom_call.1} parent=1 // pred_fallthru
      _
    // Predicated region
    $region22: #{tpu_custom_call.1} parent=1 // pred_check
      _
    $region23: #{tpu_custom_call.1} parent=1 // pred_check_branch
      %32 = sbr.rel (0) target = $region25
    $region24: #{tpu_custom_call.1} parent=1 // pred_region
      %33 = dma.done [#allocation4], 2048
    $region25: #{tpu_custom_call.1} parent=1 // pred_fallthru
      _
    %p34 = scmp.eq.s32.totalorder 0, 0
    // Predicated region
    $region26: #{tpu_custom_call.1} parent=1 // pred_check
      %p35 = pneg %p34
    $region27: #{tpu_custom_call.1} parent=1 // pred_check_branch
      %37 = sbr.rel (%p35) target = $region29
    $region28: #{tpu_custom_call.1} parent=1 // pred_region
      %vm38 = vcmask 254976
      %39 = vst.msk [vmem:[#allocation2] sm:$0x3] %vm38, 0.0
    $region29: #{tpu_custom_call.1} parent=1 // pred_fallthru
      _
    %v40 = vld [vmem:[#allocation3] sm:$0xff]
    %v41 = vld [vmem:[#allocation3 + $0x8] sm:$0xff]
    %v42 = vld [vmem:[#allocation3 + $0x10] sm:$0xff]
    %v43 = vld [vmem:[#allocation3 + $0x18] sm:$0xff]
    %v44 = vld [vmem:[#allocation3 + $0x20] sm:$0xff]
    %v45 = vld [vmem:[#allocation3 + $0x28] sm:$0xff]
    %v46 = vld [vmem:[#allocation3 + $0x30] sm:$0xff]
    %v47 = vld [vmem:[#allocation3 + $0x38] sm:$0xff]
    %v48 = vld [vmem:[#allocation3 + $0x40] sm:$0xff]
    %v49 = vld [vmem:[#allocation3 + $0x48] sm:$0xff]
    %v50 = vld [vmem:[#allocation3 + $0x50] sm:$0xff]
    %v51 = vld [vmem:[#allocation3 + $0x58] sm:$0xff]
    %v52 = vld [vmem:[#allocation3 + $0x60] sm:$0xff]
    %v53 = vld [vmem:[#allocation3 + $0x68] sm:$0xff]
    %v54 = vld [vmem:[#allocation3 + $0x70] sm:$0xff]
    %v55 = vld [vmem:[#allocation3 + $0x78] sm:$0xff]
    %v56 = vld [vmem:[#allocation2] sm:$0x3]
    %v57 = vadd.f32 %v40, %v41
    %58 = vadd.xlane.f32.xlu0 %v57
    %v59 = vpop.xlane.xlu0 %58
    %v60 = vadd.f32 %v42, %v43
    %61 = vadd.xlane.f32.xlu0 %v60
    %v62 = vpop.xlane.xlu0 %61
    %v63 = vadd.f32 %v44, %v45
    %64 = vadd.xlane.f32.xlu0 %v63
    %v65 = vpop.xlane.xlu0 %64
    %v66 = vadd.f32 %v46, %v47
    %67 = vadd.xlane.f32.xlu0 %v66
    %v68 = vpop.xlane.xlu0 %67
    %v69 = vadd.f32 %v48, %v49
    %70 = vadd.xlane.f32.xlu0 %v69
    %v71 = vpop.xlane.xlu0 %70
    %v72 = vadd.f32 %v50, %v51
    %73 = vadd.xlane.f32.xlu0 %v72
    %v74 = vpop.xlane.xlu0 %73
    %v75 = vadd.f32 %v52, %v53
    %76 = vadd.xlane.f32.xlu0 %v75
    %v77 = vpop.xlane.xlu0 %76
    %v78 = vadd.f32 %v54, %v55
    %79 = vadd.xlane.f32.xlu0 %v78
    %v80 = vpop.xlane.xlu0 %79
    %v89 = vlaneseq
    %v90 = vand.u32 %v89, 127
    %v91 = vlaneseq
    %v92 = vshrl.u32 %v91, 7
    %v93 = vsub.s32 %v90, %v92
    %v94 = vrot.slane %v59, %v93
    %v95 = vadd.s32 %v90, 4294967288
    %v96 = vlaneseq
    %v97 = vshrl.u32 %v96, 7
    %v98 = vsub.s32 %v95, %v97
    %v99 = vrot.slane %v62, %v98
    %vm100 = vcmask 130112
    %v101 = vsel %vm100, %v99, %v94
    %v102 = vadd.s32 %v90, 4294967280
    %v103 = vlaneseq
    %v104 = vshrl.u32 %v103, 7
    %v105 = vsub.s32 %v102, %v104
    %v106 = vrot.slane %v65, %v105
    %vm107 = vcmask 195712
    %v108 = vsel %vm107, %v106, %v101
    %v109 = vadd.s32 %v90, 4294967272
    %v110 = vlaneseq
    %v111 = vshrl.u32 %v110, 7
    %v112 = vsub.s32 %v109, %v111
    %v113 = vrot.slane %v68, %v112
    %vm114 = vcmask 261312
    %v115 = vsel %vm114, %v113, %v108
    %v116 = vlaneseq
    %v117 = vshrl.u32 %v116, 7
    %v118 = vsub.s32 %v90, %v117
    %v119 = vrot.slane %v71, %v118
    %v120 = vlaneseq
    %v121 = vshrl.u32 %v120, 7
    %v122 = vsub.s32 %v95, %v121
    %v123 = vrot.slane %v74, %v122
    %v124 = vsel %vm100, %v123, %v119
    %v125 = vlaneseq
    %v126 = vshrl.u32 %v125, 7
    %v127 = vsub.s32 %v102, %v126
    %v128 = vrot.slane %v77, %v127
    %v129 = vsel %vm107, %v128, %v124
    %v130 = vlaneseq
    %v131 = vshrl.u32 %v130, 7
    %v132 = vsub.s32 %v109, %v131
    %v133 = vrot.slane %v80, %v132
    %v134 = vsel %vm114, %v133, %v129
    %vm135 = vcmask 1041409
    %v136 = vsel %vm135, %v134, %v115
    %v138 = vadd.f32 %v56, %v136
    %vm139 = vcmask 254976
    %140 = vst.msk [vmem:[#allocation2] sm:$0x3] %vm139, %v138
    // Predicated region
    $region30: #{tpu_custom_call.1} parent=1 // pred_check
      %p141 = pneg %p34
    $region31: #{tpu_custom_call.1} parent=1 // pred_check_branch
      %143 = sbr.rel (%p141) target = $region33
    $region32: #{tpu_custom_call.1} parent=1 // pred_region
      %v144 = vld [vmem:[#allocation2] sm:$0x3]
      %v145 = vmul.f32 %v144, 0.00390625
      %v146 = vld [vmem:[%s1] sm:$0x3]
      %v147 = vld [vmem:[%s2] sm:$0x3]
      %v148 = vld [vmem:[%s3] sm:$0xff]
      %v149 = vld [vmem:[%s3 + $0x8] sm:$0xff]
      %v150 = vld [vmem:[%s3 + $0x10] sm:$0xff]
      %v151 = vld [vmem:[%s3 + $0x18] sm:$0xff]
      %v152 = vld [vmem:[%s4] sm:$0xff]
      %v153 = vld [vmem:[%s4 + $0x8] sm:$0xff]
      %v154 = vld [vmem:[%s4 + $0x10] sm:$0xff]
      %v155 = vld [vmem:[%s4 + $0x18] sm:$0xff]
      %v158 = vunpack.c.l.s4 1966171168
      %v159 = vunpack.c.0.s8 %v158
      %v160 = vlaneseq
      %v161 = vshrl.u32 %v160, 7
      %v162 = vsub.s32 %v159, %v161
      %v163 = vrot.slane %v145, %v162
      %v164 = vcombine.high %v163, %v163
      %v166 = vunpack.c.l.s4 1966171168
      %v167 = vunpack.c.0.s8 %v166
      %v168 = vlaneseq
      %v169 = vshrl.u32 %v168, 7
      %v170 = vsub.s32 %v167, %v169
      %v171 = vrot.slane %v163, %v170
      %v173 = vunpack.c.l.s4 1966171168
      %v174 = vunpack.c.0.s8 %v173
      %v175 = vlaneseq
      %v176 = vshrl.u32 %v175, 7
      %v177 = vsub.s32 %v174, %v176
      %v178 = vrot.slane %v164, %v177
      %v179 = vlaneseq
      %v180 = vshrl.u32 %v179, 7
      %v181 = vsub.s32 0, %v180
      %v182 = vrot.slane %v171, %v181
      %v183 = vlaneseq
      %v184 = vshrl.u32 %v183, 7
      %v185 = vsub.s32 0, %v184
      %v186 = vrot.slane %v178, %v185
      %v189 = vmul.f32 %v182, %v146
      %v190 = vmul.f32 %v186, %v146
      %v191 = vsel %vm139, %v189, 0.0
      %192 = vadd.xlane.f32.xlu0 %v191
      %v193 = vpop.xlane.xlu0 %192
      %v194 = vsel %vm139, %v190, 0.0
      %195 = vadd.xlane.f32.xlu0 %v194
      %v196 = vpop.xlane.xlu0 %195
      %v197 = vadd.f32 %v193, %v147
      %v198 = vadd.f32 %v196, %v147
      %v199 = vmax.f32 %v197, 0.0
      %v200 = vmax.f32 %v198, 0.0
      %v205 = vlaneseq
      %v206 = vshrl.u32 %v205, 7
      %v207 = vsub.s32 0, %v206
      %v208 = vrot.slane %v148, %v207
      %210 = vbcast.lane.b32.xlu0 %v208, 256
      %v211 = vpop.permute.xlu0 %210
      %v212 = vlaneseq
      %v213 = vshrl.u32 %v212, 7
      %v214 = vsub.s32 1, %v213
      %v215 = vrot.slane %v148, %v214
      %217 = vbcast.lane.b32.xlu0 %v215, 256
      %v218 = vpop.permute.xlu0 %217
      %v219 = vlaneseq
      %v220 = vshrl.u32 %v219, 7
      %v221 = vsub.s32 2, %v220
      %v222 = vrot.slane %v148, %v221
      %224 = vbcast.lane.b32.xlu0 %v222, 256
      %v225 = vpop.permute.xlu0 %224
      %v226 = vlaneseq
      %v227 = vshrl.u32 %v226, 7
      %v228 = vsub.s32 3, %v227
      %v229 = vrot.slane %v148, %v228
      %231 = vbcast.lane.b32.xlu0 %v229, 256
      %v232 = vpop.permute.xlu0 %231
      %v233 = vlaneseq
      %v234 = vshrl.u32 %v233, 7
      %v235 = vsub.s32 4, %v234
      %v236 = vrot.slane %v148, %v235
      %238 = vbcast.lane.b32.xlu0 %v236, 256
      %v239 = vpop.permute.xlu0 %238
      %v240 = vlaneseq
      %v241 = vshrl.u32 %v240, 7
      %v242 = vsub.s32 5, %v241
      %v243 = vrot.slane %v148, %v242
      %245 = vbcast.lane.b32.xlu0 %v243, 256
      %v246 = vpop.permute.xlu0 %245
      %v247 = vlaneseq
      %v248 = vshrl.u32 %v247, 7
      %v249 = vsub.s32 6, %v248
      %v250 = vrot.slane %v148, %v249
      %252 = vbcast.lane.b32.xlu0 %v250, 256
      %v253 = vpop.permute.xlu0 %252
      %v254 = vlaneseq
      %v255 = vshrl.u32 %v254, 7
      %v256 = vsub.s32 7, %v255
      %v257 = vrot.slane %v148, %v256
      %259 = vbcast.lane.b32.xlu0 %v257, 256
      %v260 = vpop.permute.xlu0 %259
      %v261 = vlaneseq
      %v262 = vshrl.u32 %v261, 7
      %v263 = vsub.s32 0, %v262
      %v264 = vrot.slane %v149, %v263
      %266 = vbcast.lane.b32.xlu0 %v264, 256
      %v267 = vpop.permute.xlu0 %266
      %v268 = vlaneseq
      %v269 = vshrl.u32 %v268, 7
      %v270 = vsub.s32 1, %v269
      %v271 = vrot.slane %v149, %v270
      %273 = vbcast.lane.b32.xlu0 %v271, 256
      %v274 = vpop.permute.xlu0 %273
      %v275 = vlaneseq
      %v276 = vshrl.u32 %v275, 7
      %v277 = vsub.s32 2, %v276
      %v278 = vrot.slane %v149, %v277
      %280 = vbcast.lane.b32.xlu0 %v278, 256
      %v281 = vpop.permute.xlu0 %280
      %v282 = vlaneseq
      %v283 = vshrl.u32 %v282, 7
      %v284 = vsub.s32 3, %v283
      %v285 = vrot.slane %v149, %v284
      %287 = vbcast.lane.b32.xlu0 %v285, 256
      %v288 = vpop.permute.xlu0 %287
      %v289 = vlaneseq
      %v290 = vshrl.u32 %v289, 7
      %v291 = vsub.s32 4, %v290
      %v292 = vrot.slane %v149, %v291
      %294 = vbcast.lane.b32.xlu0 %v292, 256
      %v295 = vpop.permute.xlu0 %294
      %v296 = vlaneseq
      %v297 = vshrl.u32 %v296, 7
      %v298 = vsub.s32 5, %v297
      %v299 = vrot.slane %v149, %v298
      %301 = vbcast.lane.b32.xlu0 %v299, 256
      %v302 = vpop.permute.xlu0 %301
      %v303 = vlaneseq
      %v304 = vshrl.u32 %v303, 7
      %v305 = vsub.s32 6, %v304
      %v306 = vrot.slane %v149, %v305
      %308 = vbcast.lane.b32.xlu0 %v306, 256
      %v309 = vpop.permute.xlu0 %308
      %v310 = vlaneseq
      %v311 = vshrl.u32 %v310, 7
      %v312 = vsub.s32 7, %v311
      %v313 = vrot.slane %v149, %v312
      %315 = vbcast.lane.b32.xlu0 %v313, 256
      %v316 = vpop.permute.xlu0 %315
      %v317 = vlaneseq
      %v318 = vshrl.u32 %v317, 7
      %v319 = vsub.s32 0, %v318
      %v320 = vrot.slane %v150, %v319
      %322 = vbcast.lane.b32.xlu0 %v320, 256
      %v323 = vpop.permute.xlu0 %322
      %v324 = vlaneseq
      %v325 = vshrl.u32 %v324, 7
      %v326 = vsub.s32 1, %v325
      %v327 = vrot.slane %v150, %v326
      %329 = vbcast.lane.b32.xlu0 %v327, 256
      %v330 = vpop.permute.xlu0 %329
      %v331 = vlaneseq
      %v332 = vshrl.u32 %v331, 7
      %v333 = vsub.s32 2, %v332
      %v334 = vrot.slane %v150, %v333
      %336 = vbcast.lane.b32.xlu0 %v334, 256
      %v337 = vpop.permute.xlu0 %336
      %v338 = vlaneseq
      %v339 = vshrl.u32 %v338, 7
      %v340 = vsub.s32 3, %v339
      %v341 = vrot.slane %v150, %v340
      %343 = vbcast.lane.b32.xlu0 %v341, 256
      %v344 = vpop.permute.xlu0 %343
      %v345 = vlaneseq
      %v346 = vshrl.u32 %v345, 7
      %v347 = vsub.s32 4, %v346
      %v348 = vrot.slane %v150, %v347
      %350 = vbcast.lane.b32.xlu0 %v348, 256
      %v351 = vpop.permute.xlu0 %350
      %v352 = vlaneseq
      %v353 = vshrl.u32 %v352, 7
      %v354 = vsub.s32 5, %v353
      %v355 = vrot.slane %v150, %v354
      %357 = vbcast.lane.b32.xlu0 %v355, 256
      %v358 = vpop.permute.xlu0 %357
      %v359 = vlaneseq
      %v360 = vshrl.u32 %v359, 7
      %v361 = vsub.s32 6, %v360
      %v362 = vrot.slane %v150, %v361
      %364 = vbcast.lane.b32.xlu0 %v362, 256
      %v365 = vpop.permute.xlu0 %364
      %v366 = vlaneseq
      %v367 = vshrl.u32 %v366, 7
      %v368 = vsub.s32 7, %v367
      %v369 = vrot.slane %v150, %v368
      %371 = vbcast.lane.b32.xlu0 %v369, 256
      %v372 = vpop.permute.xlu0 %371
      %v373 = vlaneseq
      %v374 = vshrl.u32 %v373, 7
      %v375 = vsub.s32 0, %v374
      %v376 = vrot.slane %v151, %v375
      %378 = vbcast.lane.b32.xlu0 %v376, 256
      %v379 = vpop.permute.xlu0 %378
      %v380 = vlaneseq
      %v381 = vshrl.u32 %v380, 7
      %v382 = vsub.s32 1, %v381
      %v383 = vrot.slane %v151, %v382
      %385 = vbcast.lane.b32.xlu0 %v383, 256
      %v386 = vpop.permute.xlu0 %385
      %v387 = vlaneseq
      %v388 = vshrl.u32 %v387, 7
      %v389 = vsub.s32 2, %v388
      %v390 = vrot.slane %v151, %v389
      %392 = vbcast.lane.b32.xlu0 %v390, 256
      %v393 = vpop.permute.xlu0 %392
      %v394 = vlaneseq
      %v395 = vshrl.u32 %v394, 7
      %v396 = vsub.s32 3, %v395
      %v397 = vrot.slane %v151, %v396
      %399 = vbcast.lane.b32.xlu0 %v397, 256
      %v400 = vpop.permute.xlu0 %399
      %v401 = vlaneseq
      %v402 = vshrl.u32 %v401, 7
      %v403 = vsub.s32 4, %v402
      %v404 = vrot.slane %v151, %v403
      %406 = vbcast.lane.b32.xlu0 %v404, 256
      %v407 = vpop.permute.xlu0 %406
      %v408 = vlaneseq
      %v409 = vshrl.u32 %v408, 7
      %v410 = vsub.s32 5, %v409
      %v411 = vrot.slane %v151, %v410
      %413 = vbcast.lane.b32.xlu0 %v411, 256
      %v414 = vpop.permute.xlu0 %413
      %v415 = vlaneseq
      %v416 = vshrl.u32 %v415, 7
      %v417 = vsub.s32 6, %v416
      %v418 = vrot.slane %v151, %v417
      %420 = vbcast.lane.b32.xlu0 %v418, 256
      %v421 = vpop.permute.xlu0 %420
      %v422 = vlaneseq
      %v423 = vshrl.u32 %v422, 7
      %v424 = vsub.s32 7, %v423
      %v425 = vrot.slane %v151, %v424
      %427 = vbcast.lane.b32.xlu0 %v425, 256
      %v428 = vpop.permute.xlu0 %427
      %v461 = vmul.f32 %v199, %v211
      %v462 = vmul.f32 %v199, %v218
      %v463 = vmul.f32 %v199, %v225
      %v464 = vmul.f32 %v199, %v232
      %v465 = vmul.f32 %v199, %v239
      %v466 = vmul.f32 %v199, %v246
      %v467 = vmul.f32 %v199, %v253
      %v468 = vmul.f32 %v199, %v260
      %v469 = vmul.f32 %v199, %v267
      %v470 = vmul.f32 %v199, %v274
      %v471 = vmul.f32 %v199, %v281
      %v472 = vmul.f32 %v199, %v288
      %v473 = vmul.f32 %v199, %v295
      %v474 = vmul.f32 %v199, %v302
      %v475 = vmul.f32 %v199, %v309
      %v476 = vmul.f32 %v199, %v316
      %v477 = vmul.f32 %v199, %v323
      %v478 = vmul.f32 %v199, %v330
      %v479 = vmul.f32 %v199, %v337
      %v480 = vmul.f32 %v199, %v344
      %v481 = vmul.f32 %v199, %v351
      %v482 = vmul.f32 %v199, %v358
      %v483 = vmul.f32 %v199, %v365
      %v484 = vmul.f32 %v199, %v372
      %v485 = vmul.f32 %v199, %v379
      %v486 = vmul.f32 %v199, %v386
      %v487 = vmul.f32 %v199, %v393
      %v488 = vmul.f32 %v199, %v400
      %v489 = vmul.f32 %v199, %v407
      %v490 = vmul.f32 %v199, %v414
      %v491 = vmul.f32 %v199, %v421
      %v492 = vmul.f32 %v199, %v428
      %v493 = vmul.f32 %v200, %v211
      %v494 = vmul.f32 %v200, %v218
      %v495 = vmul.f32 %v200, %v225
      %v496 = vmul.f32 %v200, %v232
      %v497 = vmul.f32 %v200, %v239
      %v498 = vmul.f32 %v200, %v246
      %v499 = vmul.f32 %v200, %v253
      %v500 = vmul.f32 %v200, %v260
      %v501 = vmul.f32 %v200, %v267
      %v502 = vmul.f32 %v200, %v274
      %v503 = vmul.f32 %v200, %v281
      %v504 = vmul.f32 %v200, %v288
      %v505 = vmul.f32 %v200, %v295
      %v506 = vmul.f32 %v200, %v302
      %v507 = vmul.f32 %v200, %v309
      %v508 = vmul.f32 %v200, %v316
      %v509 = vmul.f32 %v200, %v323
      %v510 = vmul.f32 %v200, %v330
      %v511 = vmul.f32 %v200, %v337
      %v512 = vmul.f32 %v200, %v344
      %v513 = vmul.f32 %v200, %v351
      %v514 = vmul.f32 %v200, %v358
      %v515 = vmul.f32 %v200, %v365
      %v516 = vmul.f32 %v200, %v372
      %v517 = vmul.f32 %v200, %v379
      %v518 = vmul.f32 %v200, %v386
      %v519 = vmul.f32 %v200, %v393
      %v520 = vmul.f32 %v200, %v400
      %v521 = vmul.f32 %v200, %v407
      %v522 = vmul.f32 %v200, %v414
      %v523 = vmul.f32 %v200, %v421
      %v524 = vmul.f32 %v200, %v428
      %589 = vset.pattern.permute.xlu0 0
      %590 = vperm.xlu0 %589, %v461
      %v591 = vpop.permute.xlu0 %590
      %592 = vset.pattern.permute.xlu0 0
      %593 = vperm.xlu0 %592, %v462
      %v594 = vpop.permute.xlu0 %593
      %595 = vset.pattern.permute.xlu0 0
      %596 = vperm.xlu0 %595, %v463
      %v597 = vpop.permute.xlu0 %596
      %598 = vset.pattern.permute.xlu0 0
      %599 = vperm.xlu0 %598, %v464
      %v600 = vpop.permute.xlu0 %599
      %601 = vset.pattern.permute.xlu0 0
      %602 = vperm.xlu0 %601, %v465
      %v603 = vpop.permute.xlu0 %602
      %604 = vset.pattern.permute.xlu0 0
      %605 = vperm.xlu0 %604, %v466
      %v606 = vpop.permute.xlu0 %605
      %607 = vset.pattern.permute.xlu0 0
      %608 = vperm.xlu0 %607, %v467
      %v609 = vpop.permute.xlu0 %608
      %610 = vset.pattern.permute.xlu0 0
      %611 = vperm.xlu0 %610, %v468
      %v612 = vpop.permute.xlu0 %611
      %613 = vset.pattern.permute.xlu0 0
      %614 = vperm.xlu0 %613, %v469
      %v615 = vpop.permute.xlu0 %614
      %616 = vset.pattern.permute.xlu0 0
      %617 = vperm.xlu0 %616, %v470
      %v618 = vpop.permute.xlu0 %617
      %619 = vset.pattern.permute.xlu0 0
      %620 = vperm.xlu0 %619, %v471
      %v621 = vpop.permute.xlu0 %620
      %622 = vset.pattern.permute.xlu0 0
      %623 = vperm.xlu0 %622, %v472
      %v624 = vpop.permute.xlu0 %623
      %625 = vset.pattern.permute.xlu0 0
      %626 = vperm.xlu0 %625, %v473
      %v627 = vpop.permute.xlu0 %626
      %628 = vset.pattern.permute.xlu0 0
      %629 = vperm.xlu0 %628, %v474
      %v630 = vpop.permute.xlu0 %629
      %631 = vset.pattern.permute.xlu0 0
      %632 = vperm.xlu0 %631, %v475
      %v633 = vpop.permute.xlu0 %632
      %634 = vset.pattern.permute.xlu0 0
      %635 = vperm.xlu0 %634, %v476
      %v636 = vpop.permute.xlu0 %635
      %637 = vset.pattern.permute.xlu0 0
      %638 = vperm.xlu0 %637, %v477
      %v639 = vpop.permute.xlu0 %638
      %640 = vset.pattern.permute.xlu0 0
      %641 = vperm.xlu0 %640, %v478
      %v642 = vpop.permute.xlu0 %641
      %643 = vset.pattern.permute.xlu0 0
      %644 = vperm.xlu0 %643, %v479
      %v645 = vpop.permute.xlu0 %644
      %646 = vset.pattern.permute.xlu0 0
      %647 = vperm.xlu0 %646, %v480
      %v648 = vpop.permute.xlu0 %647
      %649 = vset.pattern.permute.xlu0 0
      %650 = vperm.xlu0 %649, %v481
      %v651 = vpop.permute.xlu0 %650
      %652 = vset.pattern.permute.xlu0 0
      %653 = vperm.xlu0 %652, %v482
      %v654 = vpop.permute.xlu0 %653
      %655 = vset.pattern.permute.xlu0 0
      %656 = vperm.xlu0 %655, %v483
      %v657 = vpop.permute.xlu0 %656
      %658 = vset.pattern.permute.xlu0 0
      %659 = vperm.xlu0 %658, %v484
      %v660 = vpop.permute.xlu0 %659
      %661 = vset.pattern.permute.xlu0 0
      %662 = vperm.xlu0 %661, %v485
      %v663 = vpop.permute.xlu0 %662
      %664 = vset.pattern.permute.xlu0 0
      %665 = vperm.xlu0 %664, %v486
      %v666 = vpop.permute.xlu0 %665
      %667 = vset.pattern.permute.xlu0 0
      %668 = vperm.xlu0 %667, %v487
      %v669 = vpop.permute.xlu0 %668
      %670 = vset.pattern.permute.xlu0 0
      %671 = vperm.xlu0 %670, %v488
      %v672 = vpop.permute.xlu0 %671
      %673 = vset.pattern.permute.xlu0 0
      %674 = vperm.xlu0 %673, %v489
      %v675 = vpop.permute.xlu0 %674
      %676 = vset.pattern.permute.xlu0 0
      %677 = vperm.xlu0 %676, %v490
      %v678 = vpop.permute.xlu0 %677
      %679 = vset.pattern.permute.xlu0 0
      %680 = vperm.xlu0 %679, %v491
      %v681 = vpop.permute.xlu0 %680
      %682 = vset.pattern.permute.xlu0 0
      %683 = vperm.xlu0 %682, %v492
      %v684 = vpop.permute.xlu0 %683
      %685 = vset.pattern.permute.xlu0 0
      %686 = vperm.xlu0 %685, %v493
      %v687 = vpop.permute.xlu0 %686
      %688 = vset.pattern.permute.xlu0 0
      %689 = vperm.xlu0 %688, %v494
      %v690 = vpop.permute.xlu0 %689
      %691 = vset.pattern.permute.xlu0 0
      %692 = vperm.xlu0 %691, %v495
      %v693 = vpop.permute.xlu0 %692
      %694 = vset.pattern.permute.xlu0 0
      %695 = vperm.xlu0 %694, %v496
      %v696 = vpop.permute.xlu0 %695
      %697 = vset.pattern.permute.xlu0 0
      %698 = vperm.xlu0 %697, %v497
      %v699 = vpop.permute.xlu0 %698
      %700 = vset.pattern.permute.xlu0 0
      %701 = vperm.xlu0 %700, %v498
      %v702 = vpop.permute.xlu0 %701
      %703 = vset.pattern.permute.xlu0 0
      %704 = vperm.xlu0 %703, %v499
      %v705 = vpop.permute.xlu0 %704
      %706 = vset.pattern.permute.xlu0 0
      %707 = vperm.xlu0 %706, %v500
      %v708 = vpop.permute.xlu0 %707
      %709 = vset.pattern.permute.xlu0 0
      %710 = vperm.xlu0 %709, %v501
      %v711 = vpop.permute.xlu0 %710
      %712 = vset.pattern.permute.xlu0 0
      %713 = vperm.xlu0 %712, %v502
      %v714 = vpop.permute.xlu0 %713
      %715 = vset.pattern.permute.xlu0 0
      %716 = vperm.xlu0 %715, %v503
      %v717 = vpop.permute.xlu0 %716
      %718 = vset.pattern.permute.xlu0 0
      %719 = vperm.xlu0 %718, %v504
      %v720 = vpop.permute.xlu0 %719
      %721 = vset.pattern.permute.xlu0 0
      %722 = vperm.xlu0 %721, %v505
      %v723 = vpop.permute.xlu0 %722
      %724 = vset.pattern.permute.xlu0 0
      %725 = vperm.xlu0 %724, %v506
      %v726 = vpop.permute.xlu0 %725
      %727 = vset.pattern.permute.xlu0 0
      %728 = vperm.xlu0 %727, %v507
      %v729 = vpop.permute.xlu0 %728
      %730 = vset.pattern.permute.xlu0 0
      %731 = vperm.xlu0 %730, %v508
      %v732 = vpop.permute.xlu0 %731
      %733 = vset.pattern.permute.xlu0 0
      %734 = vperm.xlu0 %733, %v509
      %v735 = vpop.permute.xlu0 %734
      %736 = vset.pattern.permute.xlu0 0
      %737 = vperm.xlu0 %736, %v510
      %v738 = vpop.permute.xlu0 %737
      %739 = vset.pattern.permute.xlu0 0
      %740 = vperm.xlu0 %739, %v511
      %v741 = vpop.permute.xlu0 %740
      %742 = vset.pattern.permute.xlu0 0
      %743 = vperm.xlu0 %742, %v512
      %v744 = vpop.permute.xlu0 %743
      %745 = vset.pattern.permute.xlu0 0
      %746 = vperm.xlu0 %745, %v513
      %v747 = vpop.permute.xlu0 %746
      %748 = vset.pattern.permute.xlu0 0
      %749 = vperm.xlu0 %748, %v514
      %v750 = vpop.permute.xlu0 %749
      %751 = vset.pattern.permute.xlu0 0
      %752 = vperm.xlu0 %751, %v515
      %v753 = vpop.permute.xlu0 %752
      %754 = vset.pattern.permute.xlu0 0
      %755 = vperm.xlu0 %754, %v516
      %v756 = vpop.permute.xlu0 %755
      %757 = vset.pattern.permute.xlu0 0
      %758 = vperm.xlu0 %757, %v517
      %v759 = vpop.permute.xlu0 %758
      %760 = vset.pattern.permute.xlu0 0
      %761 = vperm.xlu0 %760, %v518
      %v762 = vpop.permute.xlu0 %761
      %763 = vset.pattern.permute.xlu0 0
      %764 = vperm.xlu0 %763, %v519
      %v765 = vpop.permute.xlu0 %764
      %766 = vset.pattern.permute.xlu0 0
      %767 = vperm.xlu0 %766, %v520
      %v768 = vpop.permute.xlu0 %767
      %769 = vset.pattern.permute.xlu0 0
      %770 = vperm.xlu0 %769, %v521
      %v771 = vpop.permute.xlu0 %770
      %772 = vset.pattern.permute.xlu0 0
      %773 = vperm.xlu0 %772, %v522
      %v774 = vpop.permute.xlu0 %773
      %775 = vset.pattern.permute.xlu0 0
      %776 = vperm.xlu0 %775, %v523
      %v777 = vpop.permute.xlu0 %776
      %778 = vset.pattern.permute.xlu0 0
      %779 = vperm.xlu0 %778, %v524
      %v780 = vpop.permute.xlu0 %779
      %v781 = vlaneseq
      %v782 = vshrl.u32 %v781, 7
      %v783 = vsub.s32 %v90, %v782
      %v784 = vrot.slane %v591, %v783
      %v785 = vlaneseq
      %v786 = vshrl.u32 %v785, 7
      %v787 = vsub.s32 %v90, %v786
      %v788 = vrot.slane %v594, %v787
      %v789 = vlaneseq
      %v790 = vshrl.u32 %v789, 7
      %v791 = vsub.s32 %v90, %v790
      %v792 = vrot.slane %v597, %v791
      %v793 = vlaneseq
      %v794 = vshrl.u32 %v793, 7
      %v795 = vsub.s32 %v90, %v794
      %v796 = vrot.slane %v600, %v795
      %v797 = vlaneseq
      %v798 = vshrl.u32 %v797, 7
      %v799 = vsub.s32 %v90, %v798
      %v800 = vrot.slane %v603, %v799
      %v801 = vlaneseq
      %v802 = vshrl.u32 %v801, 7
      %v803 = vsub.s32 %v90, %v802
      %v804 = vrot.slane %v606, %v803
      %v805 = vlaneseq
      %v806 = vshrl.u32 %v805, 7
      %v807 = vsub.s32 %v90, %v806
      %v808 = vrot.slane %v609, %v807
      %v809 = vlaneseq
      %v810 = vshrl.u32 %v809, 7
      %v811 = vsub.s32 %v90, %v810
      %v812 = vrot.slane %v612, %v811
      %v813 = vlaneseq
      %v814 = vshrl.u32 %v813, 7
      %v815 = vsub.s32 %v90, %v814
      %v816 = vrot.slane %v615, %v815
      %v817 = vlaneseq
      %v818 = vshrl.u32 %v817, 7
      %v819 = vsub.s32 %v90, %v818
      %v820 = vrot.slane %v618, %v819
      %v821 = vlaneseq
      %v822 = vshrl.u32 %v821, 7
      %v823 = vsub.s32 %v90, %v822
      %v824 = vrot.slane %v621, %v823
      %v825 = vlaneseq
      %v826 = vshrl.u32 %v825, 7
      %v827 = vsub.s32 %v90, %v826
      %v828 = vrot.slane %v624, %v827
      %v829 = vlaneseq
      %v830 = vshrl.u32 %v829, 7
      %v831 = vsub.s32 %v90, %v830
      %v832 = vrot.slane %v627, %v831
      %v833 = vlaneseq
      %v834 = vshrl.u32 %v833, 7
      %v835 = vsub.s32 %v90, %v834
      %v836 = vrot.slane %v630, %v835
      %v837 = vlaneseq
      %v838 = vshrl.u32 %v837, 7
      %v839 = vsub.s32 %v90, %v838
      %v840 = vrot.slane %v633, %v839
      %v841 = vlaneseq
      %v842 = vshrl.u32 %v841, 7
      %v843 = vsub.s32 %v90, %v842
      %v844 = vrot.slane %v636, %v843
      %v845 = vlaneseq
      %v846 = vshrl.u32 %v845, 7
      %v847 = vsub.s32 %v90, %v846
      %v848 = vrot.slane %v639, %v847
      %v849 = vlaneseq
      %v850 = vshrl.u32 %v849, 7
      %v851 = vsub.s32 %v90, %v850
      %v852 = vrot.slane %v642, %v851
      %v853 = vlaneseq
      %v854 = vshrl.u32 %v853, 7
      %v855 = vsub.s32 %v90, %v854
      %v856 = vrot.slane %v645, %v855
      %v857 = vlaneseq
      %v858 = vshrl.u32 %v857, 7
      %v859 = vsub.s32 %v90, %v858
      %v860 = vrot.slane %v648, %v859
      %v861 = vlaneseq
      %v862 = vshrl.u32 %v861, 7
      %v863 = vsub.s32 %v90, %v862
      %v864 = vrot.slane %v651, %v863
      %v865 = vlaneseq
      %v866 = vshrl.u32 %v865, 7
      %v867 = vsub.s32 %v90, %v866
      %v868 = vrot.slane %v654, %v867
      %v869 = vlaneseq
      %v870 = vshrl.u32 %v869, 7
      %v871 = vsub.s32 %v90, %v870
      %v872 = vrot.slane %v657, %v871
      %v873 = vlaneseq
      %v874 = vshrl.u32 %v873, 7
      %v875 = vsub.s32 %v90, %v874
      %v876 = vrot.slane %v660, %v875
      %v877 = vlaneseq
      %v878 = vshrl.u32 %v877, 7
      %v879 = vsub.s32 %v90, %v878
      %v880 = vrot.slane %v663, %v879
      %v881 = vlaneseq
      %v882 = vshrl.u32 %v881, 7
      %v883 = vsub.s32 %v90, %v882
      %v884 = vrot.slane %v666, %v883
      %v885 = vlaneseq
      %v886 = vshrl.u32 %v885, 7
      %v887 = vsub.s32 %v90, %v886
      %v888 = vrot.slane %v669, %v887
      %v889 = vlaneseq
      %v890 = vshrl.u32 %v889, 7
      %v891 = vsub.s32 %v90, %v890
      %v892 = vrot.slane %v672, %v891
      %v893 = vlaneseq
      %v894 = vshrl.u32 %v893, 7
      %v895 = vsub.s32 %v90, %v894
      %v896 = vrot.slane %v675, %v895
      %v897 = vlaneseq
      %v898 = vshrl.u32 %v897, 7
      %v899 = vsub.s32 %v90, %v898
      %v900 = vrot.slane %v678, %v899
      %v901 = vlaneseq
      %v902 = vshrl.u32 %v901, 7
      %v903 = vsub.s32 %v90, %v902
      %v904 = vrot.slane %v681, %v903
      %v905 = vlaneseq
      %v906 = vshrl.u32 %v905, 7
      %v907 = vsub.s32 %v90, %v906
      %v908 = vrot.slane %v684, %v907
      %v909 = vlaneseq
      %v910 = vshrl.u32 %v909, 7
      %v911 = vsub.s32 %v90, %v910
      %v912 = vrot.slane %v687, %v911
      %v913 = vlaneseq
      %v914 = vshrl.u32 %v913, 7
      %v915 = vsub.s32 %v90, %v914
      %v916 = vrot.slane %v690, %v915
      %v917 = vlaneseq
      %v918 = vshrl.u32 %v917, 7
      %v919 = vsub.s32 %v90, %v918
      %v920 = vrot.slane %v693, %v919
      %v921 = vlaneseq
      %v922 = vshrl.u32 %v921, 7
      %v923 = vsub.s32 %v90, %v922
      %v924 = vrot.slane %v696, %v923
      %v925 = vlaneseq
      %v926 = vshrl.u32 %v925, 7
      %v927 = vsub.s32 %v90, %v926
      %v928 = vrot.slane %v699, %v927
      %v929 = vlaneseq
      %v930 = vshrl.u32 %v929, 7
      %v931 = vsub.s32 %v90, %v930
      %v932 = vrot.slane %v702, %v931
      %v933 = vlaneseq
      %v934 = vshrl.u32 %v933, 7
      %v935 = vsub.s32 %v90, %v934
      %v936 = vrot.slane %v705, %v935
      %v937 = vlaneseq
      %v938 = vshrl.u32 %v937, 7
      %v939 = vsub.s32 %v90, %v938
      %v940 = vrot.slane %v708, %v939
      %v941 = vlaneseq
      %v942 = vshrl.u32 %v941, 7
      %v943 = vsub.s32 %v90, %v942
      %v944 = vrot.slane %v711, %v943
      %v945 = vlaneseq
      %v946 = vshrl.u32 %v945, 7
      %v947 = vsub.s32 %v90, %v946
      %v948 = vrot.slane %v714, %v947
      %v949 = vlaneseq
      %v950 = vshrl.u32 %v949, 7
      %v951 = vsub.s32 %v90, %v950
      %v952 = vrot.slane %v717, %v951
      %v953 = vlaneseq
      %v954 = vshrl.u32 %v953, 7
      %v955 = vsub.s32 %v90, %v954
      %v956 = vrot.slane %v720, %v955
      %v957 = vlaneseq
      %v958 = vshrl.u32 %v957, 7
      %v959 = vsub.s32 %v90, %v958
      %v960 = vrot.slane %v723, %v959
      %v961 = vlaneseq
      %v962 = vshrl.u32 %v961, 7
      %v963 = vsub.s32 %v90, %v962
      %v964 = vrot.slane %v726, %v963
      %v965 = vlaneseq
      %v966 = vshrl.u32 %v965, 7
      %v967 = vsub.s32 %v90, %v966
      %v968 = vrot.slane %v729, %v967
      %v969 = vlaneseq
      %v970 = vshrl.u32 %v969, 7
      %v971 = vsub.s32 %v90, %v970
      %v972 = vrot.slane %v732, %v971
      %v973 = vlaneseq
      %v974 = vshrl.u32 %v973, 7
      %v975 = vsub.s32 %v90, %v974
      %v976 = vrot.slane %v735, %v975
      %v977 = vlaneseq
      %v978 = vshrl.u32 %v977, 7
      %v979 = vsub.s32 %v90, %v978
      %v980 = vrot.slane %v738, %v979
      %v981 = vlaneseq
      %v982 = vshrl.u32 %v981, 7
      %v983 = vsub.s32 %v90, %v982
      %v984 = vrot.slane %v741, %v983
      %v985 = vlaneseq
      %v986 = vshrl.u32 %v985, 7
      %v987 = vsub.s32 %v90, %v986
      %v988 = vrot.slane %v744, %v987
      %v989 = vlaneseq
      %v990 = vshrl.u32 %v989, 7
      %v991 = vsub.s32 %v90, %v990
      %v992 = vrot.slane %v747, %v991
      %v993 = vlaneseq
      %v994 = vshrl.u32 %v993, 7
      %v995 = vsub.s32 %v90, %v994
      %v996 = vrot.slane %v750, %v995
      %v997 = vlaneseq
      %v998 = vshrl.u32 %v997, 7
      %v999 = vsub.s32 %v90, %v998
      %v1000 = vrot.slane %v753, %v999
      %v1001 = vlaneseq
      %v1002 = vshrl.u32 %v1001, 7
      %v1003 = vsub.s32 %v90, %v1002
      %v1004 = vrot.slane %v756, %v1003
      %v1005 = vlaneseq
      %v1006 = vshrl.u32 %v1005, 7
      %v1007 = vsub.s32 %v90, %v1006
      %v1008 = vrot.slane %v759, %v1007
      %v1009 = vlaneseq
      %v1010 = vshrl.u32 %v1009, 7
      %v1011 = vsub.s32 %v90, %v1010
      %v1012 = vrot.slane %v762, %v1011
      %v1013 = vlaneseq
      %v1014 = vshrl.u32 %v1013, 7
      %v1015 = vsub.s32 %v90, %v1014
      %v1016 = vrot.slane %v765, %v1015
      %v1017 = vlaneseq
      %v1018 = vshrl.u32 %v1017, 7
      %v1019 = vsub.s32 %v90, %v1018
      %v1020 = vrot.slane %v768, %v1019
      %v1021 = vlaneseq
      %v1022 = vshrl.u32 %v1021, 7
      %v1023 = vsub.s32 %v90, %v1022
      %v1024 = vrot.slane %v771, %v1023
      %v1025 = vlaneseq
      %v1026 = vshrl.u32 %v1025, 7
      %v1027 = vsub.s32 %v90, %v1026
      %v1028 = vrot.slane %v774, %v1027
      %v1029 = vlaneseq
      %v1030 = vshrl.u32 %v1029, 7
      %v1031 = vsub.s32 %v90, %v1030
      %v1032 = vrot.slane %v777, %v1031
      %v1033 = vlaneseq
      %v1034 = vshrl.u32 %v1033, 7
      %v1035 = vsub.s32 %v90, %v1034
      %v1036 = vrot.slane %v780, %v1035
      %v1037 = vsel %vm135, %v788, %v784
      %vm1038 = vcmask 1042434
      %v1039 = vsel %vm1038, %v792, %v1037
      %vm1040 = vcmask 1043459
      %v1041 = vsel %vm1040, %v796, %v1039
      %vm1042 = vcmask 1044484
      %v1043 = vsel %vm1042, %v800, %v1041
      %vm1044 = vcmask 1045509
      %v1045 = vsel %vm1044, %v804, %v1043
      %vm1046 = vcmask 1046534
      %v1047 = vsel %vm1046, %v808, %v1045
      %vm1048 = vcmask 1047559
      %v1049 = vsel %vm1048, %v812, %v1047
      %v1050 = vsel %vm135, %v820, %v816
      %v1051 = vsel %vm1038, %v824, %v1050
      %v1052 = vsel %vm1040, %v828, %v1051
      %v1053 = vsel %vm1042, %v832, %v1052
      %v1054 = vsel %vm1044, %v836, %v1053
      %v1055 = vsel %vm1046, %v840, %v1054
      %v1056 = vsel %vm1048, %v844, %v1055
      %v1057 = vsel %vm135, %v852, %v848
      %v1058 = vsel %vm1038, %v856, %v1057
      %v1059 = vsel %vm1040, %v860, %v1058
      %v1060 = vsel %vm1042, %v864, %v1059
      %v1061 = vsel %vm1044, %v868, %v1060
      %v1062 = vsel %vm1046, %v872, %v1061
      %v1063 = vsel %vm1048, %v876, %v1062
      %v1064 = vsel %vm135, %v884, %v880
      %v1065 = vsel %vm1038, %v888, %v1064
      %v1066 = vsel %vm1040, %v892, %v1065
      %v1067 = vsel %vm1042, %v896, %v1066
      %v1068 = vsel %vm1044, %v900, %v1067
      %v1069 = vsel %vm1046, %v904, %v1068
      %v1070 = vsel %vm1048, %v908, %v1069
      %v1071 = vsel %vm135, %v916, %v912
      %v1072 = vsel %vm1038, %v920, %v1071
      %v1073 = vsel %vm1040, %v924, %v1072
      %v1074 = vsel %vm1042, %v928, %v1073
      %v1075 = vsel %vm1044, %v932, %v1074
      %v1076 = vsel %vm1046, %v936, %v1075
      %v1077 = vsel %vm1048, %v940, %v1076
      %v1078 = vsel %vm135, %v948, %v944
      %v1079 = vsel %vm1038, %v952, %v1078
      %v1080 = vsel %vm1040, %v956, %v1079
      %v1081 = vsel %vm1042, %v960, %v1080
      %v1082 = vsel %vm1044, %v964, %v1081
      %v1083 = vsel %vm1046, %v968, %v1082
      %v1084 = vsel %vm1048, %v972, %v1083
      %v1085 = vsel %vm135, %v980, %v976
      %v1086 = vsel %vm1038, %v984, %v1085
      %v1087 = vsel %vm1040, %v988, %v1086
      %v1088 = vsel %vm1042, %v992, %v1087
      %v1089 = vsel %vm1044, %v996, %v1088
      %v1090 = vsel %vm1046, %v1000, %v1089
      %v1091 = vsel %vm1048, %v1004, %v1090
      %v1092 = vsel %vm135, %v1012, %v1008
      %v1093 = vsel %vm1038, %v1016, %v1092
      %v1094 = vsel %vm1040, %v1020, %v1093
      %v1095 = vsel %vm1042, %v1024, %v1094
      %v1096 = vsel %vm1044, %v1028, %v1095
      %v1097 = vsel %vm1046, %v1032, %v1096
      %v1098 = vsel %vm1048, %v1036, %v1097
      %vm1107 = vcmask 15360
      %v1108 = vsel %vm1107, %v1049, 0.0
      %1109 = vadd.xlane.f32.xlu0 %v1108
      %v1110 = vpop.xlane.xlu0 %1109
      %v1111 = vsel %vm1107, %v1056, 0.0
      %1112 = vadd.xlane.f32.xlu0 %v1111
      %v1113 = vpop.xlane.xlu0 %1112
      %v1114 = vsel %vm1107, %v1063, 0.0
      %1115 = vadd.xlane.f32.xlu0 %v1114
      %v1116 = vpop.xlane.xlu0 %1115
      %v1117 = vsel %vm1107, %v1070, 0.0
      %1118 = vadd.xlane.f32.xlu0 %v1117
      %v1119 = vpop.xlane.xlu0 %1118
      %v1120 = vsel %vm1107, %v1077, 0.0
      %1121 = vadd.xlane.f32.xlu0 %v1120
      %v1122 = vpop.xlane.xlu0 %1121
      %v1123 = vsel %vm1107, %v1084, 0.0
      %1124 = vadd.xlane.f32.xlu0 %v1123
      %v1125 = vpop.xlane.xlu0 %1124
      %v1126 = vsel %vm1107, %v1091, 0.0
      %1127 = vadd.xlane.f32.xlu0 %v1126
      %v1128 = vpop.xlane.xlu0 %1127
      %v1129 = vsel %vm1107, %v1098, 0.0
      %1130 = vadd.xlane.f32.xlu0 %v1129
      %v1131 = vpop.xlane.xlu0 %1130
      %v1132 = vadd.f32 %v1110, %v152
      %v1133 = vadd.f32 %v1113, %v153
      %v1134 = vadd.f32 %v1116, %v154
      %v1135 = vadd.f32 %v1119, %v155
      %v1136 = vadd.f32 %v1122, %v152
      %v1137 = vadd.f32 %v1125, %v153
      %v1138 = vadd.f32 %v1128, %v154
      %v1139 = vadd.f32 %v1131, %v155
      %v1140 = vxor.u32 %v1132, 2147483648
      %v1141 = vxor.u32 %v1133, 2147483648
      %v1142 = vxor.u32 %v1134, 2147483648
      %v1143 = vxor.u32 %v1135, 2147483648
      %v1144 = vxor.u32 %v1136, 2147483648
      %v1145 = vxor.u32 %v1137, 2147483648
      %v1146 = vxor.u32 %v1138, 2147483648
      %v1147 = vxor.u32 %v1139, 2147483648
      %v1148 = vmul.f32 %v1140, 1.442695
      %v1149 = vpow.pop %v1148
      %v1150 = vmul.f32 %v1141, 1.442695
      %v1151 = vpow.pop %v1150
      %v1152 = vmul.f32 %v1142, 1.442695
      %v1153 = vpow.pop %v1152
      %v1154 = vmul.f32 %v1143, 1.442695
      %v1155 = vpow.pop %v1154
      %v1156 = vmul.f32 %v1144, 1.442695
      %v1157 = vpow.pop %v1156
      %v1158 = vmul.f32 %v1145, 1.442695
      %v1159 = vpow.pop %v1158
      %v1160 = vmul.f32 %v1146, 1.442695
      %v1161 = vpow.pop %v1160
      %v1162 = vmul.f32 %v1147, 1.442695
      %v1163 = vpow.pop %v1162
      %v1164 = vadd.f32 %v1149, 1.0
      %v1165 = vadd.f32 %v1151, 1.0
      %v1166 = vadd.f32 %v1153, 1.0
      %v1167 = vadd.f32 %v1155, 1.0
      %v1168 = vadd.f32 %v1157, 1.0
      %v1169 = vadd.f32 %v1159, 1.0
      %v1170 = vadd.f32 %v1161, 1.0
      %v1171 = vadd.f32 %v1163, 1.0
      %v1172 = vrcp.pop %v1164
      %v1173 = vmul.f32 1.0, %v1172
      %v1174 = vrcp.pop %v1165
      %v1175 = vmul.f32 1.0, %v1174
      %v1176 = vrcp.pop %v1166
      %v1177 = vmul.f32 1.0, %v1176
      %v1178 = vrcp.pop %v1167
      %v1179 = vmul.f32 1.0, %v1178
      %v1180 = vrcp.pop %v1168
      %v1181 = vmul.f32 1.0, %v1180
      %v1182 = vrcp.pop %v1169
      %v1183 = vmul.f32 1.0, %v1182
      %v1184 = vrcp.pop %v1170
      %v1185 = vmul.f32 1.0, %v1184
      %v1186 = vrcp.pop %v1171
      %v1187 = vmul.f32 1.0, %v1186
      %vm1188 = vcmask 7168
      %1189 = vst.msk [vmem:[%s5] sm:$0xff] %vm1188, %v1173
      %1190 = vst.msk [vmem:[%s5 + $0x8] sm:$0xff] %vm1188, %v1175
      %1191 = vst.msk [vmem:[%s5 + $0x10] sm:$0xff] %vm1188, %v1177
      %1192 = vst.msk [vmem:[%s5 + $0x18] sm:$0xff] %vm1188, %v1179
      %1193 = vst.msk [vmem:[%s5 + $0x20] sm:$0xff] %vm1188, %v1181
      %1194 = vst.msk [vmem:[%s5 + $0x28] sm:$0xff] %vm1188, %v1183
      %1195 = vst.msk [vmem:[%s5 + $0x30] sm:$0xff] %vm1188, %v1185
      %1196 = vst.msk [vmem:[%s5 + $0x38] sm:$0xff] %vm1188, %v1187
    $region33: #{tpu_custom_call.1} parent=1 // pred_fallthru
      _
    // Predicated region
    $region34: #{tpu_custom_call.1} parent=1 // pred_check
      _
    $region35: #{tpu_custom_call.1} parent=1 // pred_check_branch
      %1198 = sbr.rel (0) target = $region37
    $region36: #{tpu_custom_call.1} parent=1 // pred_region
      _
    $region37: #{tpu_custom_call.1} parent=1 // pred_fallthru
      _
    // Predicated region
    $region38: #{tpu_custom_call.1} parent=1 // pred_check
      _
    $region39: #{tpu_custom_call.1} parent=1 // pred_check_branch
      %1200 = sbr.rel (0) target = $region41
    $region40: #{tpu_custom_call.1} parent=1 // pred_region
      _
    $region41: #{tpu_custom_call.1} parent=1 // pred_fallthru
      _
    %1201 = vsyncpa [#allocation4], 1

</llo_original>
